<compile_context>
chip_gen: v7x
topology: tpu7x:2x2x1
jax: 0.10.0
libtpu: 0.0.40
codegen_flags: <defaults>
</compile_context>

<pallas_src>
import jax
import jax.numpy as jnp
from jax.experimental import pallas as pl
from jax.experimental.pallas import tpu as pltpu


# ---------------------------------------------------------------------------
# Pallas kernel
# ---------------------------------------------------------------------------
def _column_max_kernel(x_ref, o_ref):
    # x_ref: (TILE_P, n2, C)  ->  o_ref: (TILE_P, C), max over the n2 axis.
    o_ref[...] = jnp.max(x_ref[...], axis=1)


def column_max_pooling(x, *, tile_rows=128):
    """max over dim 2 of a (bs, n, n, C) tensor -> (bs, n, C)."""
    bs, n1, n2, C = x.shape
    P = bs * n1
    # Contiguous reshape (no transpose, no extra HBM traffic).
    x2 = x.reshape(P, n2, C)

    tile = max(1, min(tile_rows, P))
    grid = (pl.cdiv(P, tile),)

    out = pl.pallas_call(
        _column_max_kernel,
        out_shape=jax.ShapeDtypeStruct((P, C), x.dtype),
        grid=grid,
        in_specs=[pl.BlockSpec((tile, n2, C), lambda i: (i, 0, 0))],
        out_specs=pl.BlockSpec((tile, C), lambda i: (i, 0)),
        compiler_params=pltpu.CompilerParams(
            dimension_semantics=("parallel",),
            vmem_limit_bytes=32 * 1024 * 1024,
        ),
    )(x2)
    return out.reshape(bs, n1, C)


# ---------------------------------------------------------------------------
# Pure-JAX reference
# ---------------------------------------------------------------------------
def column_max_pooling_reference(x):
    return jnp.max(x, axis=2)


# ---------------------------------------------------------------------------
if __name__ == "__main__":
    key = jax.random.PRNGKey(0)

    # Test 1: shapes implied by the module (bs, n_vertices, n_vertices, C),
    # tile chosen so the grid has several steps (pipelined, megacore-parallel).
    bs, n, C = 2, 16, 32
    key, k1 = jax.random.split(key)
    x1 = jax.random.normal(k1, (bs, n, n, C), jnp.float32)
    out1 = jax.block_until_ready(column_max_pooling(x1, tile_rows=8))
    ref1 = column_max_pooling_reference(x1)
    assert out1.shape == (bs, n, C)
    assert jnp.allclose(out1, ref1), "mismatch vs reference (test 1)"

    # Test 2: row count not divisible by the tile (exercises partial blocks).
    bs2, n2_, C2 = 3, 10, 4
    key, k2 = jax.random.split(key)
    x2 = jax.random.normal(k2, (bs2, n2_, n2_, C2), jnp.float32)
    out2 = jax.block_until_ready(column_max_pooling(x2, tile_rows=8))
    ref2 = column_max_pooling_reference(x2)
    assert out2.shape == (bs2, n2_, C2)
    assert jnp.allclose(out2, ref2), "mismatch vs reference (test 2)"

    print("KERNEL_OK")
</pallas_src>

<mosaic_0001>
module attributes {stable_mosaic.version = 11 : i64} {
  func.func @_column_max_kernel(%arg0: i32, %arg1: memref<8x16x32xf32, #tpu.memory_space<vmem>>, %arg2: memref<8x32xf32, #tpu.memory_space<vmem>>) attributes {dimension_semantics = [#tpu.dimension_semantics<parallel>], iteration_bounds = array<i64: 4>, scalar_prefetch = 0 : i64, scratch_operands = 0 : i64, tpu.core_type = #tpu.core_type<tc>, window_params = [{transform_indices = @transform_0, window_bounds = array<i64: 8, 16, 32>}, {transform_indices = @transform_1, window_bounds = array<i64: 8, 32>}]} {
    %c0 = arith.constant 0 : index
    %c0_0 = arith.constant 0 : index
    %c0_1 = arith.constant 0 : index
    %0 = vector.load %arg1[%c0, %c0_0, %c0_1] : memref<8x16x32xf32, #tpu.memory_space<vmem>>, vector<8x16x32xf32>
    %cst = arith.constant dense<0xFF800000> : vector<8x32xf32>
    %1 = vector.multi_reduction <maximumf>, %0, %cst [1] : vector<8x16x32xf32> to vector<8x32xf32>
    %c0_2 = arith.constant 0 : index
    %c0_3 = arith.constant 0 : index
    %2 = vector.load %arg2[%c0_2, %c0_3] : memref<8x32xf32, #tpu.memory_space<vmem>>, vector<8x32xf32>
    tpu.vector_store %arg2[%c0_2, %c0_3], %1 {strides = array<i32>} : memref<8x32xf32, #tpu.memory_space<vmem>>, vector<8x32xf32>,
    return
  }
  func.func @transform_0(%arg0: i32) -> (i32, i32, i32) {
    %c0_i32 = arith.constant 0 : i32
    %c0_i32_0 = arith.constant 0 : i32
    %c0_i32_1 = arith.constant 0 : i32
    return %arg0, %c0_i32, %c0_i32_0 : i32, i32, i32
  }
  func.func @transform_1(%arg0: i32) -> (i32, i32) {
    %c0_i32 = arith.constant 0 : i32
    %c0_i32_0 = arith.constant 0 : i32
    return %arg0, %c0_i32 : i32, i32
  }
}

</mosaic_0001>

<llo_original>
// kernel: tpu_custom_call.1
$region0: #{tpu_custom_call.1}
  #allocation0 [shape = 'u32[]', space=smem, size = 0x4, offset = 0x4, fixed_abs, tag = 'smem constant byte address 0x4 - core index']
  #allocation1 [shape = 'u32[144,128]{1,0:T(1,128)}', space=vmem, size = 0x12000, scoped, tag = 'internal scratch']
  %s0 = inlined_call_operand.hbm [shape: f32[32,16,32], index: 0, kind: input, shape index: {}]
  %s1 = inlined_call_operand.hbm [shape: f32[32,32], index: 1, kind: output, shape index: {}]
  %s2 = sld [smem:[#allocation0]]
  $region41: #{tpu_custom_call.1} parent=0
    _
  %s4 = ssub.s32 1, %s2
  %s5 = scalar_select 0, %s4, %s2
  $region1: #{tpu_custom_call.1} parent=0
    #allocation2 [shape = 'u8[131072]{0}', space=vmem, size = 0x20000, scoped, tag = 'input window, operand 0']
    #allocation3 [shape = 's32[2]{0}', space=sflag, size = 0x8, scoped, tag = 'scoped memory for tpu_custom_call.1']
    #allocation4 [shape = 's32[2]{0}', space=sflag, size = 0x8, scoped, tag = 'scoped memory for tpu_custom_call.1']
    #allocation5 [shape = 'u8[8192]{0}', space=vmem, size = 0x2000, scoped, tag = 'output window, operand 0']
    %6 = vsyncpa [#allocation3], 0
    %s7 = scalar_lea.sflag [#allocation3], 1
    %8 = vsyncpa %s7, 0
    %9 = vsyncpa [#allocation4], 0
    %s10 = scalar_lea.sflag [#allocation4], 1
    %11 = vsyncpa %s10, 0
    loop: start=0, step=1, limit=6
    $region2: #{tpu_custom_call.1} parent=1 // loop_pre_header
      _
    $region3: #{tpu_custom_call.1} parent=1 // loop_header
      %s13 = sphi 0, %s17
      %p14 = scmp.ge.s32.totalorder %s13, 6
      %s23 = sphi 0, %s25
      %s26 = sphi 0, %s23
      %s27 = sphi 0, %s26
      %s43 = sphi 0, %s27
      %s49 = sphi 0, %s51
      %s52 = sphi 0, %s49
      %s53 = sphi 0, %s52
      %s69 = sphi 0, %s53
    $region4: #{tpu_custom_call.1} parent=1 // loop_header_branch
      %16 = sbr.rel (%p14) target = $region8
    $region5: #{tpu_custom_call.1} parent=1 // loop_body
      %s18 = ssub.s32 %s13, 1
      %s19 = ssub.s32 %s13, 2
      %s20 = sadd.s32 %s13, 1
      %s21 = ssub.s32 %s13, %s20
      %p22 = scmp.eq.s32.totalorder %s21, 0
      %s24 = sadd.s32 %s23, 1
      %s25 = scalar_select %p22, %s23, %s24
      %p28 = pneg %p22
      %p29 = scmp.eq.s32.totalorder %s13, 3
      %p30 = por %p28, %p29
      %p31 = scmp.ne.s32.totalorder %s23, %s26
      %p32 = scmp.eq.s32.totalorder %s13, 0
      %p33 = por %p31, %p32
      %p34 = scmp.ne.s32.totalorder %s23, %s26
      %p35 = scmp.eq.s32.totalorder %s18, 3
      %p36 = por %p34, %p35
      %p37 = scmp.ne.s32.totalorder %s26, %s27
      %p38 = scmp.eq.s32.totalorder %s18, 0
      %p39 = por %p37, %p38
      %p40 = scmp.ne.s32.totalorder %s26, %s27
      %p41 = scmp.eq.s32.totalorder %s19, 3
      %p42 = por %p40, %p41
      %p44 = scmp.ne.s32.totalorder %s27, %s43
      %p45 = scmp.eq.s32.totalorder %s19, 0
      %p46 = por %p44, %p45
      %s47 = ssub.s32 %s13, %s20
      %p48 = scmp.eq.s32.totalorder %s47, 0
      %s50 = sadd.s32 %s49, 1
      %s51 = scalar_select %p48, %s49, %s50
      %p54 = pneg %p48
      %p55 = scmp.eq.s32.totalorder %s13, 3
      %p56 = por %p54, %p55
      %p57 = scmp.ne.s32.totalorder %s49, %s52
      %p58 = scmp.eq.s32.totalorder %s13, 0
      %p59 = por %p57, %p58
      %p60 = scmp.ne.s32.totalorder %s49, %s52
      %p61 = scmp.eq.s32.totalorder %s18, 3
      %p62 = por %p60, %p61
      %p63 = scmp.ne.s32.totalorder %s52, %s53
      %p64 = scmp.eq.s32.totalorder %s18, 0
      %p65 = por %p63, %p64
      %p66 = scmp.ne.s32.totalorder %s52, %s53
      %p67 = scmp.eq.s32.totalorder %s19, 3
      %p68 = por %p66, %p67
      %p70 = scmp.ne.s32.totalorder %s53, %s69
      %p71 = scmp.eq.s32.totalorder %s19, 0
      %p72 = por %p70, %p71
      %p73 = scmp.le.s32.totalorder 1, %s13
      %p74 = scmp.lt.s32.totalorder %s13, 5
      %p75 = pnand %p73, %p74
      %p76 = pneg %p75
      // Predicated region
      $region9: #{tpu_custom_call.1} parent=5 // pred_check
        _
      $region10: #{tpu_custom_call.1} parent=5 // pred_check_branch
        %78 = sbr.rel (%p75) target = $region12
      $region11: #{tpu_custom_call.1} parent=5 // pred_region
        %s79 = ssub.s32 %s13, 1
      $region12: #{tpu_custom_call.1} parent=5 // pred_fallthru
        _
      %p80 = scmp.lt.s32.totalorder %s13, 4
      // Predicated region
      $region13: #{tpu_custom_call.1} parent=5 // pred_check
        %p81 = pneg %p80
      $region14: #{tpu_custom_call.1} parent=5 // pred_check_branch
        %83 = sbr.rel (%p81) target = $region16
      $region15: #{tpu_custom_call.1} parent=5 // pred_region
        // Predicated region
        $region17: #{tpu_custom_call.1} parent=15 // pred_check
          %p84 = pneg %p33
        $region18: #{tpu_custom_call.1} parent=15 // pred_check_branch
          %86 = sbr.rel (%p84) target = $region20
        $region19: #{tpu_custom_call.1} parent=15 // pred_region
          %s87 = sand.u32 %s23, 1
          %s88 = scalar_lea.sflag [#allocation3], %s87
          %s89 = sand.u32 %s23, 1
          %s90 = smul.addr %s89, 128
          %s91 = scalar_lea.vmem [#allocation2], %s90
          %s92 = smul.u32 8, %s13
          %s94 = ssub.s32 2048, 2048
          %95 = vsyncadd %s88, %s94
          %s96 = smul.addr %s92, 2
          %s97 = smul.addr %s96, 128
          %s98 = scalar_lea.hbm %s0, %s97
          %s99 = sshll.u32 %s91, 4
          %s100 = int_to_ptr.vmem [resolvable:$true] %s99
          %105 = dma.hbm_to_vmem [thread:$0]  %s98, 2048, %s100, %s88, 128, 128, 8
        $region20: #{tpu_custom_call.1} parent=15 // pred_fallthru
          _
      $region16: #{tpu_custom_call.1} parent=5 // pred_fallthru
        _
      %p106 = scmp.le.s32.totalorder 1, %s13
      %p107 = scmp.lt.s32.totalorder %s13, 5
      %p108 = pnand %p106, %p107
      %p109 = pneg %p108
      // Predicated region
      $region21: #{tpu_custom_call.1} parent=5 // pred_check
        _
      $region22: #{tpu_custom_call.1} parent=5 // pred_check_branch
        %111 = sbr.rel (%p108) target = $region24
      $region23: #{tpu_custom_call.1} parent=5 // pred_region
        %s112 = ssub.s32 %s13, 1
        %s113 = sand.u32 %s26, 1
        %s114 = scalar_lea.sflag [#allocation3], %s113
        %s115 = sand.u32 %s26, 1
        %s116 = smul.addr %s115, 128
        %s117 = scalar_lea.vmem [#allocation2], %s116
        // Predicated region
        $region25: #{tpu_custom_call.1} parent=23 // pred_check
          %p118 = pneg %p39
        $region26: #{tpu_custom_call.1} parent=23 // pred_check_branch
          %120 = sbr.rel (%p118) target = $region28
        $region27: #{tpu_custom_call.1} parent=23 // pred_region
          %121 = dma.done %s114, 2048
        $region28: #{tpu_custom_call.1} parent=23 // pred_fallthru
          _
        %s122 = sand.u32 %s26, 1
        %s123 = scalar_lea.sflag [#allocation3], %s122
        %s124 = sand.u32 %s26, 1
        %s125 = smul.addr %s124, 128
        %s126 = scalar_lea.vmem [#allocation2], %s125
        %p127 = pneg %p39
        %p128 = pneg %p36
        %p129 = pneg %p65
        %p130 = pneg %p62
        %s131 = sand.u32 %s52, 1
        %s132 = scalar_lea.sflag [#allocation4], %s131
        %s133 = sand.u32 %s52, 1
        %s134 = smul.addr %s133, 8
        %s135 = scalar_lea.vmem [#allocation5], %s134
        %s136 = smul.u32 8, %s18
        %v137 = vld [vmem:[%s117] sm:$0xff]
        %v138 = vld [vmem:[%s117 + $0x8] sm:$0xff]
        %v139 = vld [vmem:[%s117 + $0x10] sm:$0xff]
        %v140 = vld [vmem:[%s117 + $0x18] sm:$0xff]
        %v141 = vld [vmem:[%s117 + $0x20] sm:$0xff]
        %v142 = vld [vmem:[%s117 + $0x28] sm:$0xff]
        %v143 = vld [vmem:[%s117 + $0x30] sm:$0xff]
        %v144 = vld [vmem:[%s117 + $0x38] sm:$0xff]
        %v145 = vld [vmem:[%s117 + $0x40] sm:$0xff]
        %v146 = vld [vmem:[%s117 + $0x48] sm:$0xff]
        %v147 = vld [vmem:[%s117 + $0x50] sm:$0xff]
        %v148 = vld [vmem:[%s117 + $0x58] sm:$0xff]
        %v149 = vld [vmem:[%s117 + $0x60] sm:$0xff]
        %v150 = vld [vmem:[%s117 + $0x68] sm:$0xff]
        %v151 = vld [vmem:[%s117 + $0x70] sm:$0xff]
        %v152 = vld [vmem:[%s117 + $0x78] sm:$0xff]
        %vm153 = vcmask 261120
        %v154 = vsel %vm153, %v137, -inf
        %v155 = vsel %vm153, %v138, -inf
        %v156 = vmax.f32 %v154, %v155
        %v157 = vrot.slane %v156, 4
        %v158 = vmax.f32 %v156, %v157
        %v159 = vrot.slane %v158, 2
        %v160 = vmax.f32 %v158, %v159
        %v161 = vrot.slane %v160, 1
        %v162 = vmax.f32 %v160, %v161
        %v163 = vsel %vm153, %v139, -inf
        %v164 = vsel %vm153, %v140, -inf
        %v165 = vmax.f32 %v163, %v164
        %v166 = vrot.slane %v165, 4
        %v167 = vmax.f32 %v165, %v166
        %v168 = vrot.slane %v167, 2
        %v169 = vmax.f32 %v167, %v168
        %v170 = vrot.slane %v169, 1
        %v171 = vmax.f32 %v169, %v170
        %v172 = vsel %vm153, %v141, -inf
        %v173 = vsel %vm153, %v142, -inf
        %v174 = vmax.f32 %v172, %v173
        %v175 = vrot.slane %v174, 4
        %v176 = vmax.f32 %v174, %v175
        %v177 = vrot.slane %v176, 2
        %v178 = vmax.f32 %v176, %v177
        %v179 = vrot.slane %v178, 1
        %v180 = vmax.f32 %v178, %v179
        %v181 = vsel %vm153, %v143, -inf
        %v182 = vsel %vm153, %v144, -inf
        %v183 = vmax.f32 %v181, %v182
        %v184 = vrot.slane %v183, 4
        %v185 = vmax.f32 %v183, %v184
        %v186 = vrot.slane %v185, 2
        %v187 = vmax.f32 %v185, %v186
        %v188 = vrot.slane %v187, 1
        %v189 = vmax.f32 %v187, %v188
        %v190 = vsel %vm153, %v145, -inf
        %v191 = vsel %vm153, %v146, -inf
        %v192 = vmax.f32 %v190, %v191
        %v193 = vrot.slane %v192, 4
        %v194 = vmax.f32 %v192, %v193
        %v195 = vrot.slane %v194, 2
        %v196 = vmax.f32 %v194, %v195
        %v197 = vrot.slane %v196, 1
        %v198 = vmax.f32 %v196, %v197
        %v199 = vsel %vm153, %v147, -inf
        %v200 = vsel %vm153, %v148, -inf
        %v201 = vmax.f32 %v199, %v200
        %v202 = vrot.slane %v201, 4
        %v203 = vmax.f32 %v201, %v202
        %v204 = vrot.slane %v203, 2
        %v205 = vmax.f32 %v203, %v204
        %v206 = vrot.slane %v205, 1
        %v207 = vmax.f32 %v205, %v206
        %v208 = vsel %vm153, %v149, -inf
        %v209 = vsel %vm153, %v150, -inf
        %v210 = vmax.f32 %v208, %v209
        %v211 = vrot.slane %v210, 4
        %v212 = vmax.f32 %v210, %v211
        %v213 = vrot.slane %v212, 2
        %v214 = vmax.f32 %v212, %v213
        %v215 = vrot.slane %v214, 1
        %v216 = vmax.f32 %v214, %v215
        %v217 = vsel %vm153, %v151, -inf
        %v218 = vsel %vm153, %v152, -inf
        %v219 = vmax.f32 %v217, %v218
        %v220 = vrot.slane %v219, 4
        %v221 = vmax.f32 %v219, %v220
        %v222 = vrot.slane %v221, 2
        %v223 = vmax.f32 %v221, %v222
        %v224 = vrot.slane %v223, 1
        %v225 = vmax.f32 %v223, %v224
        %vm234 = vcmask 1041409
        %v235 = vsel %vm234, %v171, %v162
        %vm236 = vcmask 1042434
        %v237 = vsel %vm236, %v180, %v235
        %vm238 = vcmask 1043459
        %v239 = vsel %vm238, %v189, %v237
        %vm240 = vcmask 1044484
        %v241 = vsel %vm240, %v198, %v239
        %vm242 = vcmask 1045509
        %v243 = vsel %vm242, %v207, %v241
        %vm244 = vcmask 1046534
        %v245 = vsel %vm244, %v216, %v243
        %vm246 = vcmask 1047559
        %v247 = vsel %vm246, %v225, %v245
        %249 = vst.msk [vmem:[%s135] sm:$0xff] %vm153, %v247
        %s250 = sand.u32 %s52, 1
        %s251 = scalar_lea.sflag [#allocation4], %s250
        %s252 = sand.u32 %s52, 1
        %s253 = smul.addr %s252, 8
        %s254 = scalar_lea.vmem [#allocation5], %s253
        // Predicated region
        $region29: #{tpu_custom_call.1} parent=23 // pred_check
          %p255 = pneg %p62
        $region30: #{tpu_custom_call.1} parent=23 // pred_check_branch
          %257 = sbr.rel (%p255) target = $region32
        $region31: #{tpu_custom_call.1} parent=23 // pred_region
          %s259 = ssub.s32 128, 128
          %260 = vsyncadd %s251, %s259
          %s261 = smul.addr %s18, 128
          %s262 = scalar_lea.hbm %s1, %s261
          %s264 = sshll.u32 %s254, 4
          %s265 = int_to_ptr.vmem [resolvable:$true] %s264
          %267 = dma.vmem_to_hbm [thread:$0]  %s265, 128, %s262, %s251
        $region32: #{tpu_custom_call.1} parent=23 // pred_fallthru
          _
      $region24: #{tpu_custom_call.1} parent=5 // pred_fallthru
        _
      %p268 = scmp.le.s32.totalorder 2, %s13
      // Predicated region
      $region33: #{tpu_custom_call.1} parent=5 // pred_check
        %p269 = pneg %p268
      $region34: #{tpu_custom_call.1} parent=5 // pred_check_branch
        %271 = sbr.rel (%p269) target = $region36
      $region35: #{tpu_custom_call.1} parent=5 // pred_region
        %s272 = ssub.s32 %s13, 2
        // Predicated region
        $region37: #{tpu_custom_call.1} parent=35 // pred_check
          %p273 = pneg %p68
        $region38: #{tpu_custom_call.1} parent=35 // pred_check_branch
          %275 = sbr.rel (%p273) target = $region40
        $region39: #{tpu_custom_call.1} parent=35 // pred_region
          %s276 = sand.u32 %s53, 1
          %s277 = scalar_lea.sflag [#allocation4], %s276
          %s278 = sand.u32 %s53, 1
          %s279 = smul.addr %s278, 8
          %s280 = scalar_lea.vmem [#allocation5], %s279
          %281 = dma.done %s277, 128
        $region40: #{tpu_custom_call.1} parent=35 // pred_fallthru
          _
      $region36: #{tpu_custom_call.1} parent=5 // pred_fallthru
        _
    $region6: #{tpu_custom_call.1} parent=1 // loop_footer
      %s17 = sadd.s32 1, %s13
    $region7: #{tpu_custom_call.1} parent=1 // loop_footer_branch
      %12 = sbr.rel target = $region3
    $region8: #{tpu_custom_call.1} parent=1 // loop_exit
      _
    %282 = vsyncpa [#allocation3], 1
    %s283 = scalar_lea.sflag [#allocation3], 1
    %284 = vsyncpa %s283, 1
    %285 = vsyncpa [#allocation4], 1
    %s286 = scalar_lea.sflag [#allocation4], 1
    %287 = vsyncpa %s286, 1

</llo_original>
